<compile_context>
chip_gen: v7x
topology: tpu7x:2x2x1
jax: 0.10.0
libtpu: 0.0.40
codegen_flags: <defaults>
</compile_context>

<pallas_src>
import functools

import jax
import jax.numpy as jnp
from jax.experimental import pallas as pl
from jax.experimental.pallas import tpu as pltpu


_LANE = 128
_SUBLANE = 8


def _round_up(x, m):
    return ((x + m - 1) // m) * m


def _apply_activation(h, name):
    if name is None:
        return h
    if name == "relu":
        return jnp.maximum(h, 0.0)
    if name == "lrelu":
        # get_activation() in the reference uses lrelu_param=0.2 (not PyTorch's
        # nn.LeakyReLU default of 0.01).
        return jnp.where(h > 0.0, h, 0.2 * h)
    if name == "tanh":
        return jnp.tanh(h)
    if name == "sigmoid":
        return jax.nn.sigmoid(h)
    raise NotImplementedError(name)


def _num_tensorcores():
    """TensorCores a single ("parallel",) Pallas grid axis can shard across:
    2 on v7x (and v4-style megacore), 1 on v5e/v6e."""
    try:
        kind = jax.devices()[0].device_kind.lower()
    except Exception:
        return 1
    if "v7" in kind or "7x" in kind:
        return 2
    if "v4" in kind:
        return 2
    return 1


@functools.lru_cache(maxsize=None)
def _lane_pack_supported(pack, cout, out_dtype_name):
    """Eagerly compile + run a tiny kernel containing the
    (rows, cout) -> (rows/pack, pack*cout) lane-dense repack-and-store, so a
    Mosaic lowering failure is caught here, in Python, even if mlp_pallas is
    later called inside jax.jit (where a traced try/except could not see it).
    The result is cached per (pack, cout, out dtype)."""
    rows = _SUBLANE * pack
    out_dt = jnp.dtype(out_dtype_name)

    def probe_kernel(x_ref, o_ref):
        o_ref[...] = x_ref[...].reshape(rows // pack, pack * cout).astype(o_ref.dtype)

    try:
        # Values exactly representable in bf16/f16/f32 so the round-trip check
        # is exact for any out dtype.
        x = (jnp.arange(rows * cout, dtype=jnp.float32) % 251.0).reshape(rows, cout)
        out = pl.pallas_call(
            probe_kernel,
            out_shape=jax.ShapeDtypeStruct((rows // pack, pack * cout), out_dt),
        )(x)
        out = jax.block_until_ready(out)
        return bool(jnp.array_equal(out.astype(jnp.float32).reshape(rows, cout), x))
    except Exception:
        # TODO(synk): this Mosaic build cannot lower the in-kernel lane-dense
        # repack; fall back to the plain (masked-store) output layout.
        return False


def _mlp_kernel(x_ref, *refs, num_weights, activation, pack, compute_dtype):
    """One grid step: the full MLP on one row-tile of x.

    refs = (w1_ref, ..., wL_ref, out_ref).  All weights are VMEM-resident
    (constant index_map).  Hidden ReLUs are fused between the MXU matmuls
    with f32 accumulation; the optional final activation runs in f32.  When
    pack > 1 the (rows, cout) result is repacked row-major to
    (rows/pack, pack*cout) so the single store is lane-dense (unmasked vst)."""
    w_refs = refs[:num_weights]
    o_ref = refs[num_weights]

    h = x_ref[...]
    for li, w_ref in enumerate(w_refs):
        if li > 0:  # nn.Sequential order: ReLU before every layer but the first
            h = jnp.maximum(h, 0.0)
        # Cast (no-op for f32 path) so bf16 weights hit the bf16 MXU path;
        # accumulate in f32 either way.
        h = jnp.dot(h.astype(compute_dtype), w_ref[...],
                    preferred_element_type=jnp.float32)
    h = _apply_activation(h, activation)  # f32

    if pack > 1:
        rows, cols = h.shape
        h = h.reshape(rows // pack, pack * cols)  # row-major lane-dense repack
    o_ref[...] = h.astype(o_ref.dtype)


def mlp_pallas(x, weights, activation=None, *, row_tile=4096,
               compute_dtype=jnp.bfloat16, pack_output=True):
    """x: [N, cin].  weights: list of [in_i, out_i] arrays (PyTorch
    nn.Linear.weight transposed).  Returns [N, cout] in x.dtype.

    compute_dtype=jnp.bfloat16 (default) runs the MXU matmuls in bf16 with
    f32 accumulation and f32 activations; pass compute_dtype=None for an
    exact f32 path."""
    n, cin = x.shape
    cin = int(cin)
    cout = int(weights[-1].shape[1])
    out_dtype = x.dtype

    if compute_dtype is not None and x.dtype != compute_dtype:
        x = x.astype(compute_dtype)
    cdt = x.dtype
    weights = [w.astype(cdt) for w in weights]

    # ---- lane-dense output packing ----------------------------------------
    # `pack` logical rows of width cout fill one 128-lane row, turning the
    # output store into an unmasked vst.  Capability is probed eagerly and
    # cached (see _lane_pack_supported) -- no traced try/except.
    pack = 1
    if pack_output and cout < _LANE and _LANE % cout == 0:
        p = _LANE // cout
        if _lane_pack_supported(p, cout, jnp.dtype(out_dtype).name):
            pack = p
    granule = _SUBLANE * pack  # keeps (rt, cin) and (rt/pack, 128) aligned

    # ---- pick the effective row tile ---------------------------------------
    rt = max(granule, (int(row_tile) // granule) * granule)

    # VMEM budget, lane-padding aware: every per-row buffer is padded to 128
    # lanes in VMEM, so count padded bytes for the double-buffered x/out
    # tiles, the resident (double-buffered) weights and ~3 f32 intermediates
    # of the widest layer.
    lanes = lambda d: _round_up(int(d), _LANE)
    isz_c = jnp.dtype(cdt).itemsize
    isz_o = jnp.dtype(out_dtype).itemsize
    per_row = 2 * lanes(cin) * isz_c                              # x tile
    per_row += 2 * (cout if pack > 1 else lanes(cout)) * isz_o    # out tile
    widest = max([cin] + [int(w.shape[1]) for w in weights])
    per_row += 3 * lanes(widest) * 4                              # f32 intermediates
    w_bytes = 2 * sum(_round_up(int(w.shape[0]), _SUBLANE) * lanes(w.shape[1]) * isz_c
                      for w in weights)
    budget = 24 * 1024 * 1024       # < 32 MiB scoped default on v6e/v7x
    vmem_limit = 28 * 1024 * 1024   # raised explicitly for v5e (16 MiB default)
    rt_cap = max(granule, ((budget - w_bytes) // per_row) // granule * granule)
    rt = min(rt, rt_cap)

    # Never tile beyond the problem, and only split small problems into
    # multiple grid steps where the ("parallel",) axis can actually shard
    # across TensorCores (v7x: 2 TCs; v5e/v6e: 1 TC, splitting just adds
    # ~0.35 us/step of overhead).
    rt = min(rt, _round_up(max(n, 1), granule))
    num_tc = _num_tensorcores()
    if num_tc > 1 and n > granule:
        rt = min(rt, _round_up(pl.cdiv(n, num_tc), granule))
    rt = max(rt, granule)

    # ---- pad rows to a tile multiple (padded rows are zero; sliced off) ----
    n_pad = _round_up(max(n, 1), rt)
    x_pad = jnp.pad(x, ((0, n_pad - n), (0, 0))) if n_pad != n else x
    grid = (n_pad // rt,)

    kernel = functools.partial(
        _mlp_kernel, num_weights=len(weights), activation=activation,
        pack=pack, compute_dtype=cdt)

    in_specs = [pl.BlockSpec((rt, cin), lambda i: (i, 0))]
    # Weights: constant index_map -> whole array resident every grid step.
    in_specs += [pl.BlockSpec(w.shape, lambda i: (0, 0)) for w in weights]
    out_spec = pl.BlockSpec((rt // pack, pack * cout), lambda i: (i, 0))

    flops = 2 * n_pad * sum(int(w.shape[0]) * int(w.shape[1]) for w in weights)
    transcendentals = n_pad * cout if activation in ("tanh", "sigmoid") else 0
    bytes_accessed = (n_pad * cin * isz_c + n_pad * cout * isz_o
                      + sum(int(w.size) for w in weights) * isz_c)

    out = pl.pallas_call(
        kernel,
        out_shape=jax.ShapeDtypeStruct((n_pad // pack, pack * cout), out_dtype),
        grid_spec=pltpu.PrefetchScalarGridSpec(
            num_scalar_prefetch=0,
            grid=grid,
            in_specs=in_specs,
            out_specs=out_spec,
        ),
        compiler_params=pltpu.CompilerParams(
            dimension_semantics=("parallel",),
            vmem_limit_bytes=vmem_limit),
        cost_estimate=pl.CostEstimate(
            flops=flops, transcendentals=transcendentals,
            bytes_accessed=bytes_accessed),
    )(x_pad, *weights)
    # Row-major reshape exactly inverts the in-kernel lane-dense repack.
    return out.reshape(n_pad, cout)[:n]


def mlp_forward(x, weights, activation=None, **kwargs):
    """Apply the MLP over the last axis of an arbitrarily-shaped input."""
    lead = x.shape[:-1]
    y = mlp_pallas(x.reshape(-1, x.shape[-1]), weights, activation, **kwargs)
    return y.reshape(*lead, y.shape[-1])


def make_mlp_weights(key, cin, cout, num_layers, nf=256):
    """Deterministic bias-free Linear weights, returned in [in, out] layout."""
    if num_layers == 1:
        dims = [(cin, cout)]
    else:
        dims = [(cin, nf)] + [(nf, nf)] * (num_layers - 2) + [(nf, cout)]
    weights = []
    for (din, dout) in dims:
        key, sub = jax.random.split(key)
        bound = 1.0 / jnp.sqrt(din)  # kaiming-uniform-ish scale, deterministic
        weights.append(jax.random.uniform(sub, (din, dout), jnp.float32, -bound, bound))
    return weights


def mlp_reference(x, weights, activation=None, compute_dtype=None):
    """Pure-jnp reference matching the kernel's dtype path."""
    h = x
    for li, w in enumerate(weights):
        if li > 0:
            h = jnp.maximum(h, 0.0)
        if compute_dtype is not None:
            h = h.astype(compute_dtype)
            w = w.astype(compute_dtype)
        h = jnp.dot(h, w, preferred_element_type=jnp.float32)
    return _apply_activation(h, activation)


if __name__ == "__main__":
    # Small config: MLP(cin=32, cout=16, num_layers=3, nf=64, activation='tanh')
    cin, cout, num_layers, nf = 32, 16, 3, 64
    activation = "tanh"

    key = jax.random.PRNGKey(0)
    kx, kw = jax.random.split(key)
    # Leading dims flatten to 2*6*21 = 252 rows (deliberately NOT a multiple of
    # the tile / packing granule) to exercise the padding path.
    x = jax.random.normal(kx, (2, 6, 21, cin), jnp.float32)
    weights = make_mlp_weights(kw, cin, cout, num_layers, nf)

    # Default (bf16-MXU, f32-accumulate) path.
    out = mlp_forward(x, weights, activation=activation)
    out = jax.block_until_ready(out)
    ref = mlp_reference(x.reshape(-1, cin), weights, activation=activation,
                        compute_dtype=jnp.bfloat16)
    ref = ref.reshape(*x.shape[:-1], cout)
    assert out.shape == x.shape[:-1] + (cout,)
    assert out.dtype == x.dtype
    assert jnp.allclose(out, ref, atol=5e-3, rtol=5e-3), "bf16 path mismatch"

    # Exact f32 path (compute_dtype=None keeps the input dtype end to end).
    out32 = mlp_forward(x, weights, activation=activation, compute_dtype=None)
    out32 = jax.block_until_ready(out32)
    ref32 = mlp_reference(x.reshape(-1, cin), weights, activation=activation)
    ref32 = ref32.reshape(*x.shape[:-1], cout)
    assert jnp.allclose(out32, ref32, atol=1e-5, rtol=1e-5), "f32 path mismatch"

    print("KERNEL_OK")
</pallas_src>

<mosaic_0001>
module attributes {stable_mosaic.version = 11 : i64} {
  func.func @probe_kernel(%arg0: memref<64x16xf32, #tpu.memory_space<vmem>>, %arg1: memref<8x128xf32, #tpu.memory_space<vmem>>) attributes {dimension_semantics = [], scalar_prefetch = 0 : i64, scratch_operands = 0 : i64, tpu.core_type = #tpu.core_type<tc>} {
    %c0 = arith.constant 0 : index
    %c0_0 = arith.constant 0 : index
    %0 = vector.load %arg0[%c0, %c0_0] : memref<64x16xf32, #tpu.memory_space<vmem>>, vector<64x16xf32>
    %1 = vector.shape_cast %0 : vector<64x16xf32> to vector<8x128xf32>
    %c0_1 = arith.constant 0 : index
    %c0_2 = arith.constant 0 : index
    %2 = vector.load %arg1[%c0_1, %c0_2] : memref<8x128xf32, #tpu.memory_space<vmem>>, vector<8x128xf32>
    tpu.vector_store %arg1[%c0_1, %c0_2], %1 {strides = array<i32>} : memref<8x128xf32, #tpu.memory_space<vmem>>, vector<8x128xf32>,
    return
  }
}

module attributes {stable_mosaic.version = 11 : i64} {
  func.func @_mlp_kernel(%arg0: i32, %arg1: memref<256x32xbf16, #tpu.memory_space<vmem>>, %arg2: memref<32x64xbf16, #tpu.memory_space<vmem>>, %arg3: memref<64x64xbf16, #tpu.memory_space<vmem>>, %arg4: memref<64x16xbf16, #tpu.memory_space<vmem>>, %arg5: memref<256x16xf32, #tpu.memory_space<vmem>>) attributes {dimension_semantics = [#tpu.dimension_semantics<parallel>], iteration_bounds = array<i64: 1>, scalar_prefetch = 0 : i64, scratch_operands = 0 : i64, tpu.core_type = #tpu.core_type<tc>, window_params = [{transform_indices = @transform_0, window_bounds = array<i64: 256, 32>}, {pipeline_mode = #tpu.pipeline_mode<synchronous>, transform_indices = @transform_1, window_bounds = array<i64: 32, 64>}, {pipeline_mode = #tpu.pipeline_mode<synchronous>, transform_indices = @transform_2, window_bounds = array<i64: 64, 64>}, {pipeline_mode = #tpu.pipeline_mode<synchronous>, transform_indices = @transform_3, window_bounds = array<i64: 64, 16>}, {transform_indices = @transform_4, window_bounds = array<i64: 256, 16>}]} {
    %c0 = arith.constant 0 : index
    %c0_0 = arith.constant 0 : index
    %0 = vector.load %arg1[%c0, %c0_0] : memref<256x32xbf16, #tpu.memory_space<vmem>>, vector<256x32xbf16>
    %c0_1 = arith.constant 0 : index
    %c0_2 = arith.constant 0 : index
    %1 = vector.load %arg2[%c0_1, %c0_2] : memref<32x64xbf16, #tpu.memory_space<vmem>>, vector<32x64xbf16>
    %cst = arith.constant dense<0.000000e+00> : vector<256x64xf32>
    %2 = tpu.matmul %0, %1, %cst {dimension_numbers = #tpu.dot_dimension_numbers<[1], [0], [0], [1], [0, 0, 1, 1], [], []>} : vector<256x32xbf16>, vector<32x64xbf16>, vector<256x64xf32> -> vector<256x64xf32>
    %cst_3 = arith.constant 0.000000e+00 : f32
    %3 = vector.broadcast %cst_3 : f32 to vector<256x64xf32>
    %4 = arith.maximumf %2, %3 : vector<256x64xf32>
    %5 = arith.truncf %4 : vector<256x64xf32> to vector<256x64xbf16>
    %c0_4 = arith.constant 0 : index
    %c0_5 = arith.constant 0 : index
    %6 = vector.load %arg3[%c0_4, %c0_5] : memref<64x64xbf16, #tpu.memory_space<vmem>>, vector<64x64xbf16>
    %cst_6 = arith.constant dense<0.000000e+00> : vector<256x64xf32>
    %7 = tpu.matmul %5, %6, %cst_6 {dimension_numbers = #tpu.dot_dimension_numbers<[1], [0], [0], [1], [0, 0, 1, 1], [], []>} : vector<256x64xbf16>, vector<64x64xbf16>, vector<256x64xf32> -> vector<256x64xf32>
    %cst_7 = arith.constant 0.000000e+00 : f32
    %8 = vector.broadcast %cst_7 : f32 to vector<256x64xf32>
    %9 = arith.maximumf %7, %8 : vector<256x64xf32>
    %10 = arith.truncf %9 : vector<256x64xf32> to vector<256x64xbf16>
    %c0_8 = arith.constant 0 : index
    %c0_9 = arith.constant 0 : index
    %11 = vector.load %arg4[%c0_8, %c0_9] : memref<64x16xbf16, #tpu.memory_space<vmem>>, vector<64x16xbf16>
    %cst_10 = arith.constant dense<0.000000e+00> : vector<256x16xf32>
    %12 = tpu.matmul %10, %11, %cst_10 {dimension_numbers = #tpu.dot_dimension_numbers<[1], [0], [0], [1], [0, 0, 1, 1], [], []>} : vector<256x64xbf16>, vector<64x16xbf16>, vector<256x16xf32> -> vector<256x16xf32>
    %13 = math.tanh %12 : vector<256x16xf32>
    %c0_11 = arith.constant 0 : index
    %c0_12 = arith.constant 0 : index
    %14 = vector.load %arg5[%c0_11, %c0_12] : memref<256x16xf32, #tpu.memory_space<vmem>>, vector<256x16xf32>
    tpu.vector_store %arg5[%c0_11, %c0_12], %13 {strides = array<i32>} : memref<256x16xf32, #tpu.memory_space<vmem>>, vector<256x16xf32>,
    return
  }
  func.func @transform_0(%arg0: i32) -> (i32, i32) {
    %c0_i32 = arith.constant 0 : i32
    %c0_i32_0 = arith.constant 0 : i32
    return %arg0, %c0_i32 : i32, i32
  }
  func.func @transform_1(%arg0: i32) -> (i32, i32) {
    %c0_i32 = arith.constant 0 : i32
    %c0_i32_0 = arith.constant 0 : i32
    %c0_i32_1 = arith.constant 0 : i32
    return %c0_i32, %c0_i32_0 : i32, i32
  }
  func.func @transform_2(%arg0: i32) -> (i32, i32) {
    %c0_i32 = arith.constant 0 : i32
    %c0_i32_0 = arith.constant 0 : i32
    %c0_i32_1 = arith.constant 0 : i32
    return %c0_i32, %c0_i32_0 : i32, i32
  }
  func.func @transform_3(%arg0: i32) -> (i32, i32) {
    %c0_i32 = arith.constant 0 : i32
    %c0_i32_0 = arith.constant 0 : i32
    %c0_i32_1 = arith.constant 0 : i32
    return %c0_i32, %c0_i32_0 : i32, i32
  }
  func.func @transform_4(%arg0: i32) -> (i32, i32) {
    %c0_i32 = arith.constant 0 : i32
    %c0_i32_0 = arith.constant 0 : i32
    return %arg0, %c0_i32 : i32, i32
  }
}

</mosaic_0001>

<llo_original>
// kernel: tpu_custom_call.1
$region0: #{tpu_custom_call.1}
  #allocation0 [shape = 'u32[]', space=smem, size = 0x4, offset = 0x4, fixed_abs, tag = 'smem constant byte address 0x4 - core index']
  #allocation1 [shape = 'u32[144,128]{1,0:T(1,128)}', space=vmem, size = 0x12000, scoped, tag = 'internal scratch']
  %s0 = inlined_call_operand.vmem [shape: bf16[256,32], index: 0, kind: input, shape index: {}]
  %s1 = inlined_call_operand.vmem [shape: bf16[32,64], index: 1, kind: input, shape index: {}]
  %s2 = inlined_call_operand.vmem [shape: bf16[64,64], index: 2, kind: input, shape index: {}]
  %s3 = inlined_call_operand.vmem [shape: bf16[64,16], index: 3, kind: input, shape index: {}]
  %s4 = inlined_call_operand.vmem [shape: f32[256,16], index: 4, kind: output, shape index: {}]
  %s5 = sld [smem:[#allocation0]]
  $region26: #{tpu_custom_call.1} parent=0
    _
  %s7 = ssub.s32 1, %s5
  %s8 = scalar_select 0, %s7, %s5
  // Predicated region
  $region2: #{tpu_custom_call.1} parent=0 // pred_check
    _
  $region3: #{tpu_custom_call.1} parent=0 // pred_check_branch
    %10 = sbr.rel (0) target = $region5
  $region4: #{tpu_custom_call.1} parent=0 // pred_region
    _
  $region5: #{tpu_custom_call.1} parent=0 // pred_fallthru
    _
  // Predicated region
  $region6: #{tpu_custom_call.1} parent=0 // pred_check
    _
  $region7: #{tpu_custom_call.1} parent=0 // pred_check_branch
    %12 = sbr.rel (0) target = $region9
  $region8: #{tpu_custom_call.1} parent=0 // pred_region
    _
  $region9: #{tpu_custom_call.1} parent=0 // pred_fallthru
    _
  // Predicated region
  $region10: #{tpu_custom_call.1} parent=0 // pred_check
    _
  $region11: #{tpu_custom_call.1} parent=0 // pred_check_branch
    %14 = sbr.rel (0) target = $region13
  $region12: #{tpu_custom_call.1} parent=0 // pred_region
    _
  $region13: #{tpu_custom_call.1} parent=0 // pred_fallthru
    _
  // Predicated region
  $region14: #{tpu_custom_call.1} parent=0 // pred_check
    _
  $region15: #{tpu_custom_call.1} parent=0 // pred_check_branch
    %16 = sbr.rel (0) target = $region17
  $region16: #{tpu_custom_call.1} parent=0 // pred_region
    _
  $region17: #{tpu_custom_call.1} parent=0 // pred_fallthru
    _
  %v18 = vld [vmem:[%s0] sm:$0xf]
  %v19 = vld [vmem:[%s0 + $0x4] sm:$0xf]
  %v20 = vld [vmem:[%s0 + $0x8] sm:$0xf]
  %v21 = vld [vmem:[%s0 + $0xc] sm:$0xf]
  %v22 = vld [vmem:[%s0 + $0x10] sm:$0xf]
  %v23 = vld [vmem:[%s0 + $0x14] sm:$0xf]
  %v24 = vld [vmem:[%s0 + $0x18] sm:$0xf]
  %v25 = vld [vmem:[%s0 + $0x1c] sm:$0xf]
  %v26 = vld [vmem:[%s0 + $0x20] sm:$0xf]
  %v27 = vld [vmem:[%s0 + $0x24] sm:$0xf]
  %v28 = vld [vmem:[%s0 + $0x28] sm:$0xf]
  %v29 = vld [vmem:[%s0 + $0x2c] sm:$0xf]
  %v30 = vld [vmem:[%s0 + $0x30] sm:$0xf]
  %v31 = vld [vmem:[%s0 + $0x34] sm:$0xf]
  %v32 = vld [vmem:[%s0 + $0x38] sm:$0xf]
  %v33 = vld [vmem:[%s0 + $0x3c] sm:$0xf]
  %v34 = vld [vmem:[%s0 + $0x40] sm:$0xf]
  %v35 = vld [vmem:[%s0 + $0x44] sm:$0xf]
  %v36 = vld [vmem:[%s0 + $0x48] sm:$0xf]
  %v37 = vld [vmem:[%s0 + $0x4c] sm:$0xf]
  %v38 = vld [vmem:[%s0 + $0x50] sm:$0xf]
  %v39 = vld [vmem:[%s0 + $0x54] sm:$0xf]
  %v40 = vld [vmem:[%s0 + $0x58] sm:$0xf]
  %v41 = vld [vmem:[%s0 + $0x5c] sm:$0xf]
  %v42 = vld [vmem:[%s0 + $0x60] sm:$0xf]
  %v43 = vld [vmem:[%s0 + $0x64] sm:$0xf]
  %v44 = vld [vmem:[%s0 + $0x68] sm:$0xf]
  %v45 = vld [vmem:[%s0 + $0x6c] sm:$0xf]
  %v46 = vld [vmem:[%s0 + $0x70] sm:$0xf]
  %v47 = vld [vmem:[%s0 + $0x74] sm:$0xf]
  %v48 = vld [vmem:[%s0 + $0x78] sm:$0xf]
  %v49 = vld [vmem:[%s0 + $0x7c] sm:$0xf]
  %v50 = vld [vmem:[%s1] sm:$0xf]
  %v51 = vld [vmem:[%s1 + $0x4] sm:$0xf]
  %v52 = vld [vmem:[%s1 + $0x8] sm:$0xf]
  %v53 = vld [vmem:[%s1 + $0xc] sm:$0xf]
  %v86 = vunpack.c.l.b16 %v18
  %v87 = vunpack.c.l.b16 %v19
  %v88 = vunpack.c.l.b16 %v20
  %v89 = vunpack.c.l.b16 %v21
  %v90 = vunpack.c.l.b16 %v22
  %v91 = vunpack.c.l.b16 %v23
  %v92 = vunpack.c.l.b16 %v24
  %v93 = vunpack.c.l.b16 %v25
  %v94 = vunpack.c.l.b16 %v26
  %v95 = vunpack.c.l.b16 %v27
  %v96 = vunpack.c.l.b16 %v28
  %v97 = vunpack.c.l.b16 %v29
  %v98 = vunpack.c.l.b16 %v30
  %v99 = vunpack.c.l.b16 %v31
  %v100 = vunpack.c.l.b16 %v32
  %v101 = vunpack.c.l.b16 %v33
  %v102 = vunpack.c.l.b16 %v34
  %v103 = vunpack.c.l.b16 %v35
  %v104 = vunpack.c.l.b16 %v36
  %v105 = vunpack.c.l.b16 %v37
  %v106 = vunpack.c.l.b16 %v38
  %v107 = vunpack.c.l.b16 %v39
  %v108 = vunpack.c.l.b16 %v40
  %v109 = vunpack.c.l.b16 %v41
  %v110 = vunpack.c.l.b16 %v42
  %v111 = vunpack.c.l.b16 %v43
  %v112 = vunpack.c.l.b16 %v44
  %v113 = vunpack.c.l.b16 %v45
  %v114 = vunpack.c.l.b16 %v46
  %v115 = vunpack.c.l.b16 %v47
  %v116 = vunpack.c.l.b16 %v48
  %v117 = vunpack.c.l.b16 %v49
  %v118 = vpack.c.b16 %v87, %v86
  %v119 = vpack.c.b16 %v89, %v88
  %v120 = vpack.c.b16 %v91, %v90
  %v121 = vpack.c.b16 %v93, %v92
  %v122 = vpack.c.b16 %v95, %v94
  %v123 = vpack.c.b16 %v97, %v96
  %v124 = vpack.c.b16 %v99, %v98
  %v125 = vpack.c.b16 %v101, %v100
  %v126 = vpack.c.b16 %v103, %v102
  %v127 = vpack.c.b16 %v105, %v104
  %v128 = vpack.c.b16 %v107, %v106
  %v129 = vpack.c.b16 %v109, %v108
  %v130 = vpack.c.b16 %v111, %v110
  %v131 = vpack.c.b16 %v113, %v112
  %v132 = vpack.c.b16 %v115, %v114
  %v133 = vpack.c.b16 %v117, %v116
  %v138 = vunpack.c.l.b16 %v50
  %v139 = vunpack.c.l.b16 %v51
  %v140 = vunpack.c.l.b16 %v52
  %v141 = vunpack.c.l.b16 %v53
  %v142 = vpack.c.b16 %v139, %v138
  %v143 = vpack.c.b16 %v141, %v140
  %vm146 = vcmask 261120
  %v148 = vsel %vm146, %v118, 0
  %v151 = vsel %vm146, %v119, 0
  %v154 = vsel %vm146, %v120, 0
  %v157 = vsel %vm146, %v121, 0
  %v160 = vsel %vm146, %v122, 0
  %v163 = vsel %vm146, %v123, 0
  %v166 = vsel %vm146, %v124, 0
  %v169 = vsel %vm146, %v125, 0
  %v172 = vsel %vm146, %v126, 0
  %v175 = vsel %vm146, %v127, 0
  %v178 = vsel %vm146, %v128, 0
  %v181 = vsel %vm146, %v129, 0
  %v184 = vsel %vm146, %v130, 0
  %v187 = vsel %vm146, %v131, 0
  %v190 = vsel %vm146, %v132, 0
  %v193 = vsel %vm146, %v133, 0
  %195 = vmatprep.subr.bf16.mxu0 0
  %196 = vmatpush1.bf16.msra.mxu0 %v142
  %197 = vmatprep.subr.bf16.mxu0 0
  %198 = vmatpush1.bf16.msra.mxu0 %v143
  %199 = vmatprep.subr.bf16.mxu0 0
  %200 = vmatpush1.bf16.msra.mxu0 0
  %201 = vmatprep.subr.bf16.mxu0 0
  %202 = vmatpush1.bf16.msra.mxu0 0
  %203 = vmatprep.subr.bf16.mxu0 0
  %204 = vmatpush1.bf16.msra.mxu0 0
  %205 = vmatprep.subr.bf16.mxu0 0
  %206 = vmatpush1.bf16.msra.mxu0 0
  %207 = vmatprep.subr.bf16.mxu0 0
  %208 = vmatpush1.bf16.msra.mxu0 0
  %209 = vmatprep.subr.bf16.mxu0 0
  %210 = vmatpush1.bf16.msra.mxu0 0
  %211 = vmatprep.subr.bf16.mxu0 0
  %212 = vmatpush1.bf16.msra.mxu0 0
  %213 = vmatprep.subr.bf16.mxu0 0
  %214 = vmatpush1.bf16.msra.mxu0 0
  %215 = vmatprep.subr.bf16.mxu0 0
  %216 = vmatpush1.bf16.msra.mxu0 0
  %217 = vmatprep.subr.bf16.mxu0 0
  %218 = vmatpush1.bf16.msra.mxu0 0
  %219 = vmatprep.subr.bf16.mxu0 0
  %220 = vmatpush1.bf16.msra.mxu0 0
  %221 = vmatprep.subr.bf16.mxu0 0
  %222 = vmatpush1.bf16.msra.mxu0 0
  %223 = vmatprep.subr.bf16.mxu0 0
  %224 = vmatpush1.bf16.msra.mxu0 0
  %225 = vmatprep.subr.bf16.mxu0 0
  %226 = vmatpush1.bf16.msra.mxu0 0
  %227 = vmatprep.mubr.bf16.mxu0 0
  %228 = vmatmul.mubr.bf16.gmra.mrb[0].mxu0 %v148
  %v229 = vpop.f32.mrb[0].mxu0
  %v230 = vadd.f32 0.0, %v229
  %v231 = vpop.f32.mrb[0].mxu0
  %v232 = vpop.f32.mrb[0].mxu0
  %v233 = vadd.f32 0.0, %v232
  %v234 = vpop.f32.mrb[0].mxu0
  %235 = vmatprep.mubr.bf16.mxu0 0
  %236 = vmatmul.mubr.bf16.gmra.mrb[0].mxu0 %v151
  %v237 = vpop.f32.mrb[0].mxu0
  %v238 = vadd.f32 0.0, %v237
  %v239 = vpop.f32.mrb[0].mxu0
  %v240 = vpop.f32.mrb[0].mxu0
  %v241 = vadd.f32 0.0, %v240
  %v242 = vpop.f32.mrb[0].mxu0
  %243 = vmatprep.mubr.bf16.mxu0 0
  %244 = vmatmul.mubr.bf16.gmra.mrb[0].mxu0 %v154
  %v245 = vpop.f32.mrb[0].mxu0
  %v246 = vadd.f32 0.0, %v245
  %v247 = vpop.f32.mrb[0].mxu0
  %v248 = vpop.f32.mrb[0].mxu0
  %v249 = vadd.f32 0.0, %v248
  %v250 = vpop.f32.mrb[0].mxu0
  %251 = vmatprep.mubr.bf16.mxu0 0
  %252 = vmatmul.mubr.bf16.gmra.mrb[0].mxu0 %v157
  %v253 = vpop.f32.mrb[0].mxu0
  %v254 = vadd.f32 0.0, %v253
  %v255 = vpop.f32.mrb[0].mxu0
  %v256 = vpop.f32.mrb[0].mxu0
  %v257 = vadd.f32 0.0, %v256
  %v258 = vpop.f32.mrb[0].mxu0
  %259 = vmatprep.mubr.bf16.mxu0 0
  %260 = vmatmul.mubr.bf16.gmra.mrb[0].mxu0 %v160
  %v261 = vpop.f32.mrb[0].mxu0
  %v262 = vadd.f32 0.0, %v261
  %v263 = vpop.f32.mrb[0].mxu0
  %v264 = vpop.f32.mrb[0].mxu0
  %v265 = vadd.f32 0.0, %v264
  %v266 = vpop.f32.mrb[0].mxu0
  %267 = vmatprep.mubr.bf16.mxu0 0
  %268 = vmatmul.mubr.bf16.gmra.mrb[0].mxu0 %v163
  %v269 = vpop.f32.mrb[0].mxu0
  %v270 = vadd.f32 0.0, %v269
  %v271 = vpop.f32.mrb[0].mxu0
  %v272 = vpop.f32.mrb[0].mxu0
  %v273 = vadd.f32 0.0, %v272
  %v274 = vpop.f32.mrb[0].mxu0
  %275 = vmatprep.mubr.bf16.mxu0 0
  %276 = vmatmul.mubr.bf16.gmra.mrb[0].mxu0 %v166
  %v277 = vpop.f32.mrb[0].mxu0
  %v278 = vadd.f32 0.0, %v277
  %v279 = vpop.f32.mrb[0].mxu0
  %v280 = vpop.f32.mrb[0].mxu0
  %v281 = vadd.f32 0.0, %v280
  %v282 = vpop.f32.mrb[0].mxu0
  %283 = vmatprep.mubr.bf16.mxu0 0
  %284 = vmatmul.mubr.bf16.gmra.mrb[0].mxu0 %v169
  %v285 = vpop.f32.mrb[0].mxu0
  %v286 = vadd.f32 0.0, %v285
  %v287 = vpop.f32.mrb[0].mxu0
  %v288 = vpop.f32.mrb[0].mxu0
  %v289 = vadd.f32 0.0, %v288
  %v290 = vpop.f32.mrb[0].mxu0
  %291 = vmatprep.mubr.bf16.mxu0 0
  %292 = vmatmul.mubr.bf16.gmra.mrb[0].mxu0 %v172
  %v293 = vpop.f32.mrb[0].mxu0
  %v294 = vadd.f32 0.0, %v293
  %v295 = vpop.f32.mrb[0].mxu0
  %v296 = vpop.f32.mrb[0].mxu0
  %v297 = vadd.f32 0.0, %v296
  %v298 = vpop.f32.mrb[0].mxu0
  %299 = vmatprep.mubr.bf16.mxu0 0
  %300 = vmatmul.mubr.bf16.gmra.mrb[0].mxu0 %v175
  %v301 = vpop.f32.mrb[0].mxu0
  %v302 = vadd.f32 0.0, %v301
  %v303 = vpop.f32.mrb[0].mxu0
  %v304 = vpop.f32.mrb[0].mxu0
  %v305 = vadd.f32 0.0, %v304
  %v306 = vpop.f32.mrb[0].mxu0
  %307 = vmatprep.mubr.bf16.mxu0 0
  %308 = vmatmul.mubr.bf16.gmra.mrb[0].mxu0 %v178
  %v309 = vpop.f32.mrb[0].mxu0
  %v310 = vadd.f32 0.0, %v309
  %v311 = vpop.f32.mrb[0].mxu0
  %v312 = vpop.f32.mrb[0].mxu0
  %v313 = vadd.f32 0.0, %v312
  %v314 = vpop.f32.mrb[0].mxu0
  %315 = vmatprep.mubr.bf16.mxu0 0
  %316 = vmatmul.mubr.bf16.gmra.mrb[0].mxu0 %v181
  %v317 = vpop.f32.mrb[0].mxu0
  %v318 = vadd.f32 0.0, %v317
  %v319 = vpop.f32.mrb[0].mxu0
  %v320 = vpop.f32.mrb[0].mxu0
  %v321 = vadd.f32 0.0, %v320
  %v322 = vpop.f32.mrb[0].mxu0
  %323 = vmatprep.mubr.bf16.mxu0 0
  %324 = vmatmul.mubr.bf16.gmra.mrb[0].mxu0 %v184
  %v325 = vpop.f32.mrb[0].mxu0
  %v326 = vadd.f32 0.0, %v325
  %v327 = vpop.f32.mrb[0].mxu0
  %v328 = vpop.f32.mrb[0].mxu0
  %v329 = vadd.f32 0.0, %v328
  %v330 = vpop.f32.mrb[0].mxu0
  %331 = vmatprep.mubr.bf16.mxu0 0
  %332 = vmatmul.mubr.bf16.gmra.mrb[0].mxu0 %v187
  %v333 = vpop.f32.mrb[0].mxu0
  %v334 = vadd.f32 0.0, %v333
  %v335 = vpop.f32.mrb[0].mxu0
  %v336 = vpop.f32.mrb[0].mxu0
  %v337 = vadd.f32 0.0, %v336
  %v338 = vpop.f32.mrb[0].mxu0
  %339 = vmatprep.mubr.bf16.mxu0 0
  %340 = vmatmul.mubr.bf16.gmra.mrb[0].mxu0 %v190
  %v341 = vpop.f32.mrb[0].mxu0
  %v342 = vadd.f32 0.0, %v341
  %v343 = vpop.f32.mrb[0].mxu0
  %v344 = vpop.f32.mrb[0].mxu0
  %v345 = vadd.f32 0.0, %v344
  %v346 = vpop.f32.mrb[0].mxu0
  %347 = vmatprep.mubr.bf16.mxu0 0
  %348 = vmatmul.mubr.bf16.gmra.mrb[0].mxu0 %v193
  %v349 = vpop.f32.mrb[0].mxu0
  %v350 = vadd.f32 0.0, %v349
  %v351 = vpop.f32.mrb[0].mxu0
  %v352 = vpop.f32.mrb[0].mxu0
  %v353 = vadd.f32 0.0, %v352
  %v354 = vpop.f32.mrb[0].mxu0
  %355 = vdwg.mxu0
  %v356 = vmax.f32 %v230, 0.0
  %v357 = vmax.f32 %v233, 0.0
  %v358 = vmax.f32 %v238, 0.0
  %v359 = vmax.f32 %v241, 0.0
  %v360 = vmax.f32 %v246, 0.0
  %v361 = vmax.f32 %v249, 0.0
  %v362 = vmax.f32 %v254, 0.0
  %v363 = vmax.f32 %v257, 0.0
  %v364 = vmax.f32 %v262, 0.0
  %v365 = vmax.f32 %v265, 0.0
  %v366 = vmax.f32 %v270, 0.0
  %v367 = vmax.f32 %v273, 0.0
  %v368 = vmax.f32 %v278, 0.0
  %v369 = vmax.f32 %v281, 0.0
  %v370 = vmax.f32 %v286, 0.0
  %v371 = vmax.f32 %v289, 0.0
  %v372 = vmax.f32 %v294, 0.0
  %v373 = vmax.f32 %v297, 0.0
  %v374 = vmax.f32 %v302, 0.0
  %v375 = vmax.f32 %v305, 0.0
  %v376 = vmax.f32 %v310, 0.0
  %v377 = vmax.f32 %v313, 0.0
  %v378 = vmax.f32 %v318, 0.0
  %v379 = vmax.f32 %v321, 0.0
  %v380 = vmax.f32 %v326, 0.0
  %v381 = vmax.f32 %v329, 0.0
  %v382 = vmax.f32 %v334, 0.0
  %v383 = vmax.f32 %v337, 0.0
  %v384 = vmax.f32 %v342, 0.0
  %v385 = vmax.f32 %v345, 0.0
  %v386 = vmax.f32 %v350, 0.0
  %v387 = vmax.f32 %v353, 0.0
  %v388 = vpack.c.bf16 %v357, %v356
  %v389 = vpack.c.bf16 %v359, %v358
  %v390 = vpack.c.bf16 %v361, %v360
  %v391 = vpack.c.bf16 %v363, %v362
  %v392 = vpack.c.bf16 %v365, %v364
  %v393 = vpack.c.bf16 %v367, %v366
  %v394 = vpack.c.bf16 %v369, %v368
  %v395 = vpack.c.bf16 %v371, %v370
  %v396 = vpack.c.bf16 %v373, %v372
  %v397 = vpack.c.bf16 %v375, %v374
  %v398 = vpack.c.bf16 %v377, %v376
  %v399 = vpack.c.bf16 %v379, %v378
  %v400 = vpack.c.bf16 %v381, %v380
  %v401 = vpack.c.bf16 %v383, %v382
  %v402 = vpack.c.bf16 %v385, %v384
  %v403 = vpack.c.bf16 %v387, %v386
  %v404 = vld [vmem:[%s2] sm:$0xf]
  %v405 = vld [vmem:[%s2 + $0x4] sm:$0xf]
  %v406 = vld [vmem:[%s2 + $0x8] sm:$0xf]
  %v407 = vld [vmem:[%s2 + $0xc] sm:$0xf]
  %v408 = vld [vmem:[%s2 + $0x10] sm:$0xf]
  %v409 = vld [vmem:[%s2 + $0x14] sm:$0xf]
  %v410 = vld [vmem:[%s2 + $0x18] sm:$0xf]
  %v411 = vld [vmem:[%s2 + $0x1c] sm:$0xf]
  %v420 = vunpack.c.l.b16 %v404
  %v421 = vunpack.c.l.b16 %v405
  %v422 = vunpack.c.l.b16 %v406
  %v423 = vunpack.c.l.b16 %v407
  %v424 = vunpack.c.l.b16 %v408
  %v425 = vunpack.c.l.b16 %v409
  %v426 = vunpack.c.l.b16 %v410
  %v427 = vunpack.c.l.b16 %v411
  %v428 = vpack.c.b16 %v421, %v420
  %v429 = vpack.c.b16 %v423, %v422
  %v430 = vpack.c.b16 %v425, %v424
  %v431 = vpack.c.b16 %v427, %v426
  %vm436 = vcmask 523264
  %v438 = vsel %vm436, %v388, 0
  %v441 = vsel %vm436, %v389, 0
  %v444 = vsel %vm436, %v390, 0
  %v447 = vsel %vm436, %v391, 0
  %v450 = vsel %vm436, %v392, 0
  %v453 = vsel %vm436, %v393, 0
  %v456 = vsel %vm436, %v394, 0
  %v459 = vsel %vm436, %v395, 0
  %v462 = vsel %vm436, %v396, 0
  %v465 = vsel %vm436, %v397, 0
  %v468 = vsel %vm436, %v398, 0
  %v471 = vsel %vm436, %v399, 0
  %v474 = vsel %vm436, %v400, 0
  %v477 = vsel %vm436, %v401, 0
  %v480 = vsel %vm436, %v402, 0
  %v483 = vsel %vm436, %v403, 0
  %485 = vmatprep.subr.bf16.mxu0 0
  %486 = vmatpush1.bf16.msra.mxu0 %v428
  %487 = vmatprep.subr.bf16.mxu0 0
  %488 = vmatpush1.bf16.msra.mxu0 %v429
  %489 = vmatprep.subr.bf16.mxu0 0
  %490 = vmatpush1.bf16.msra.mxu0 %v430
  %491 = vmatprep.subr.bf16.mxu0 0
  %492 = vmatpush1.bf16.msra.mxu0 %v431
  %493 = vmatprep.subr.bf16.mxu0 0
  %494 = vmatpush1.bf16.msra.mxu0 0
  %495 = vmatprep.subr.bf16.mxu0 0
  %496 = vmatpush1.bf16.msra.mxu0 0
  %497 = vmatprep.subr.bf16.mxu0 0
  %498 = vmatpush1.bf16.msra.mxu0 0
  %499 = vmatprep.subr.bf16.mxu0 0
  %500 = vmatpush1.bf16.msra.mxu0 0
  %501 = vmatprep.subr.bf16.mxu0 0
  %502 = vmatpush1.bf16.msra.mxu0 0
  %503 = vmatprep.subr.bf16.mxu0 0
  %504 = vmatpush1.bf16.msra.mxu0 0
  %505 = vmatprep.subr.bf16.mxu0 0
  %506 = vmatpush1.bf16.msra.mxu0 0
  %507 = vmatprep.subr.bf16.mxu0 0
  %508 = vmatpush1.bf16.msra.mxu0 0
  %509 = vmatprep.subr.bf16.mxu0 0
  %510 = vmatpush1.bf16.msra.mxu0 0
  %511 = vmatprep.subr.bf16.mxu0 0
  %512 = vmatpush1.bf16.msra.mxu0 0
  %513 = vmatprep.subr.bf16.mxu0 0
  %514 = vmatpush1.bf16.msra.mxu0 0
  %515 = vmatprep.subr.bf16.mxu0 0
  %516 = vmatpush1.bf16.msra.mxu0 0
  %517 = vmatprep.mubr.bf16.mxu0 0
  %518 = vmatmul.mubr.bf16.gmra.mrb[0].mxu0 %v438
  %v519 = vpop.f32.mrb[0].mxu0
  %v520 = vadd.f32 0.0, %v519
  %v521 = vpop.f32.mrb[0].mxu0
  %v522 = vpop.f32.mrb[0].mxu0
  %v523 = vadd.f32 0.0, %v522
  %v524 = vpop.f32.mrb[0].mxu0
  %525 = vmatprep.mubr.bf16.mxu0 0
  %526 = vmatmul.mubr.bf16.gmra.mrb[0].mxu0 %v441
  %v527 = vpop.f32.mrb[0].mxu0
  %v528 = vadd.f32 0.0, %v527
  %v529 = vpop.f32.mrb[0].mxu0
  %v530 = vpop.f32.mrb[0].mxu0
  %v531 = vadd.f32 0.0, %v530
  %v532 = vpop.f32.mrb[0].mxu0
  %533 = vmatprep.mubr.bf16.mxu0 0
  %534 = vmatmul.mubr.bf16.gmra.mrb[0].mxu0 %v444
  %v535 = vpop.f32.mrb[0].mxu0
  %v536 = vadd.f32 0.0, %v535
  %v537 = vpop.f32.mrb[0].mxu0
  %v538 = vpop.f32.mrb[0].mxu0
  %v539 = vadd.f32 0.0, %v538
  %v540 = vpop.f32.mrb[0].mxu0
  %541 = vmatprep.mubr.bf16.mxu0 0
  %542 = vmatmul.mubr.bf16.gmra.mrb[0].mxu0 %v447
  %v543 = vpop.f32.mrb[0].mxu0
  %v544 = vadd.f32 0.0, %v543
  %v545 = vpop.f32.mrb[0].mxu0
  %v546 = vpop.f32.mrb[0].mxu0
  %v547 = vadd.f32 0.0, %v546
  %v548 = vpop.f32.mrb[0].mxu0
  %549 = vmatprep.mubr.bf16.mxu0 0
  %550 = vmatmul.mubr.bf16.gmra.mrb[0].mxu0 %v450
  %v551 = vpop.f32.mrb[0].mxu0
  %v552 = vadd.f32 0.0, %v551
  %v553 = vpop.f32.mrb[0].mxu0
  %v554 = vpop.f32.mrb[0].mxu0
  %v555 = vadd.f32 0.0, %v554
  %v556 = vpop.f32.mrb[0].mxu0
  %557 = vmatprep.mubr.bf16.mxu0 0
  %558 = vmatmul.mubr.bf16.gmra.mrb[0].mxu0 %v453
  %v559 = vpop.f32.mrb[0].mxu0
  %v560 = vadd.f32 0.0, %v559
  %v561 = vpop.f32.mrb[0].mxu0
  %v562 = vpop.f32.mrb[0].mxu0
  %v563 = vadd.f32 0.0, %v562
  %v564 = vpop.f32.mrb[0].mxu0
  %565 = vmatprep.mubr.bf16.mxu0 0
  %566 = vmatmul.mubr.bf16.gmra.mrb[0].mxu0 %v456
  %v567 = vpop.f32.mrb[0].mxu0
  %v568 = vadd.f32 0.0, %v567
  %v569 = vpop.f32.mrb[0].mxu0
  %v570 = vpop.f32.mrb[0].mxu0
  %v571 = vadd.f32 0.0, %v570
  %v572 = vpop.f32.mrb[0].mxu0
  %573 = vmatprep.mubr.bf16.mxu0 0
  %574 = vmatmul.mubr.bf16.gmra.mrb[0].mxu0 %v459
  %v575 = vpop.f32.mrb[0].mxu0
  %v576 = vadd.f32 0.0, %v575
  %v577 = vpop.f32.mrb[0].mxu0
  %v578 = vpop.f32.mrb[0].mxu0
  %v579 = vadd.f32 0.0, %v578
  %v580 = vpop.f32.mrb[0].mxu0
  %581 = vmatprep.mubr.bf16.mxu0 0
  %582 = vmatmul.mubr.bf16.gmra.mrb[0].mxu0 %v462
  %v583 = vpop.f32.mrb[0].mxu0
  %v584 = vadd.f32 0.0, %v583
  %v585 = vpop.f32.mrb[0].mxu0
  %v586 = vpop.f32.mrb[0].mxu0
  %v587 = vadd.f32 0.0, %v586
  %v588 = vpop.f32.mrb[0].mxu0
  %589 = vmatprep.mubr.bf16.mxu0 0
  %590 = vmatmul.mubr.bf16.gmra.mrb[0].mxu0 %v465
  %v591 = vpop.f32.mrb[0].mxu0
  %v592 = vadd.f32 0.0, %v591
  %v593 = vpop.f32.mrb[0].mxu0
  %v594 = vpop.f32.mrb[0].mxu0
  %v595 = vadd.f32 0.0, %v594
  %v596 = vpop.f32.mrb[0].mxu0
  %597 = vmatprep.mubr.bf16.mxu0 0
  %598 = vmatmul.mubr.bf16.gmra.mrb[0].mxu0 %v468
  %v599 = vpop.f32.mrb[0].mxu0
  %v600 = vadd.f32 0.0, %v599
  %v601 = vpop.f32.mrb[0].mxu0
  %v602 = vpop.f32.mrb[0].mxu0
  %v603 = vadd.f32 0.0, %v602
  %v604 = vpop.f32.mrb[0].mxu0
  %605 = vmatprep.mubr.bf16.mxu0 0
  %606 = vmatmul.mubr.bf16.gmra.mrb[0].mxu0 %v471
  %v607 = vpop.f32.mrb[0].mxu0
  %v608 = vadd.f32 0.0, %v607
  %v609 = vpop.f32.mrb[0].mxu0
  %v610 = vpop.f32.mrb[0].mxu0
  %v611 = vadd.f32 0.0, %v610
  %v612 = vpop.f32.mrb[0].mxu0
  %613 = vmatprep.mubr.bf16.mxu0 0
  %614 = vmatmul.mubr.bf16.gmra.mrb[0].mxu0 %v474
  %v615 = vpop.f32.mrb[0].mxu0
  %v616 = vadd.f32 0.0, %v615
  %v617 = vpop.f32.mrb[0].mxu0
  %v618 = vpop.f32.mrb[0].mxu0
  %v619 = vadd.f32 0.0, %v618
  %v620 = vpop.f32.mrb[0].mxu0
  %621 = vmatprep.mubr.bf16.mxu0 0
  %622 = vmatmul.mubr.bf16.gmra.mrb[0].mxu0 %v477
  %v623 = vpop.f32.mrb[0].mxu0
  %v624 = vadd.f32 0.0, %v623
  %v625 = vpop.f32.mrb[0].mxu0
  %v626 = vpop.f32.mrb[0].mxu0
  %v627 = vadd.f32 0.0, %v626
  %v628 = vpop.f32.mrb[0].mxu0
  %629 = vmatprep.mubr.bf16.mxu0 0
  %630 = vmatmul.mubr.bf16.gmra.mrb[0].mxu0 %v480
  %v631 = vpop.f32.mrb[0].mxu0
  %v632 = vadd.f32 0.0, %v631
  %v633 = vpop.f32.mrb[0].mxu0
  %v634 = vpop.f32.mrb[0].mxu0
  %v635 = vadd.f32 0.0, %v634
  %v636 = vpop.f32.mrb[0].mxu0
  %637 = vmatprep.mubr.bf16.mxu0 0
  %638 = vmatmul.mubr.bf16.gmra.mrb[0].mxu0 %v483
  %v639 = vpop.f32.mrb[0].mxu0
  %v640 = vadd.f32 0.0, %v639
  %v641 = vpop.f32.mrb[0].mxu0
  %v642 = vpop.f32.mrb[0].mxu0
  %v643 = vadd.f32 0.0, %v642
  %v644 = vpop.f32.mrb[0].mxu0
  %645 = vdwg.mxu0
  %v646 = vmax.f32 %v520, 0.0
  %v647 = vmax.f32 %v523, 0.0
  %v648 = vmax.f32 %v528, 0.0
  %v649 = vmax.f32 %v531, 0.0
  %v650 = vmax.f32 %v536, 0.0
  %v651 = vmax.f32 %v539, 0.0
  %v652 = vmax.f32 %v544, 0.0
  %v653 = vmax.f32 %v547, 0.0
  %v654 = vmax.f32 %v552, 0.0
  %v655 = vmax.f32 %v555, 0.0
  %v656 = vmax.f32 %v560, 0.0
  %v657 = vmax.f32 %v563, 0.0
  %v658 = vmax.f32 %v568, 0.0
  %v659 = vmax.f32 %v571, 0.0
  %v660 = vmax.f32 %v576, 0.0
  %v661 = vmax.f32 %v579, 0.0
  %v662 = vmax.f32 %v584, 0.0
  %v663 = vmax.f32 %v587, 0.0
  %v664 = vmax.f32 %v592, 0.0
  %v665 = vmax.f32 %v595, 0.0
  %v666 = vmax.f32 %v600, 0.0
  %v667 = vmax.f32 %v603, 0.0
  %v668 = vmax.f32 %v608, 0.0
  %v669 = vmax.f32 %v611, 0.0
  %v670 = vmax.f32 %v616, 0.0
  %v671 = vmax.f32 %v619, 0.0
  %v672 = vmax.f32 %v624, 0.0
  %v673 = vmax.f32 %v627, 0.0
  %v674 = vmax.f32 %v632, 0.0
  %v675 = vmax.f32 %v635, 0.0
  %v676 = vmax.f32 %v640, 0.0
  %v677 = vmax.f32 %v643, 0.0
  %v678 = vpack.c.bf16 %v647, %v646
  %v679 = vpack.c.bf16 %v649, %v648
  %v680 = vpack.c.bf16 %v651, %v650
  %v681 = vpack.c.bf16 %v653, %v652
  %v682 = vpack.c.bf16 %v655, %v654
  %v683 = vpack.c.bf16 %v657, %v656
  %v684 = vpack.c.bf16 %v659, %v658
  %v685 = vpack.c.bf16 %v661, %v660
  %v686 = vpack.c.bf16 %v663, %v662
  %v687 = vpack.c.bf16 %v665, %v664
  %v688 = vpack.c.bf16 %v667, %v666
  %v689 = vpack.c.bf16 %v669, %v668
  %v690 = vpack.c.bf16 %v671, %v670
  %v691 = vpack.c.bf16 %v673, %v672
  %v692 = vpack.c.bf16 %v675, %v674
  %v693 = vpack.c.bf16 %v677, %v676
  %v694 = vld [vmem:[%s3] sm:$0xf]
  %v695 = vld [vmem:[%s3 + $0x4] sm:$0xf]
  %v696 = vld [vmem:[%s3 + $0x8] sm:$0xf]
  %v697 = vld [vmem:[%s3 + $0xc] sm:$0xf]
  %v698 = vld [vmem:[%s3 + $0x10] sm:$0xf]
  %v699 = vld [vmem:[%s3 + $0x14] sm:$0xf]
  %v700 = vld [vmem:[%s3 + $0x18] sm:$0xf]
  %v701 = vld [vmem:[%s3 + $0x1c] sm:$0xf]
  %v710 = vunpack.c.l.b16 %v694
  %v711 = vunpack.c.l.b16 %v695
  %v712 = vunpack.c.l.b16 %v696
  %v713 = vunpack.c.l.b16 %v697
  %v714 = vunpack.c.l.b16 %v698
  %v715 = vunpack.c.l.b16 %v699
  %v716 = vunpack.c.l.b16 %v700
  %v717 = vunpack.c.l.b16 %v701
  %v718 = vpack.c.b16 %v711, %v710
  %v719 = vpack.c.b16 %v713, %v712
  %v720 = vpack.c.b16 %v715, %v714
  %v721 = vpack.c.b16 %v717, %v716
  %v727 = vsel %vm436, %v678, 0
  %v730 = vsel %vm436, %v679, 0
  %v733 = vsel %vm436, %v680, 0
  %v736 = vsel %vm436, %v681, 0
  %v739 = vsel %vm436, %v682, 0
  %v742 = vsel %vm436, %v683, 0
  %v745 = vsel %vm436, %v684, 0
  %v748 = vsel %vm436, %v685, 0
  %v751 = vsel %vm436, %v686, 0
  %v754 = vsel %vm436, %v687, 0
  %v757 = vsel %vm436, %v688, 0
  %v760 = vsel %vm436, %v689, 0
  %v763 = vsel %vm436, %v690, 0
  %v766 = vsel %vm436, %v691, 0
  %v769 = vsel %vm436, %v692, 0
  %v772 = vsel %vm436, %v693, 0
  %774 = vmatprep.subr.bf16.mxu0 0
  %775 = vmatpush1.bf16.msra.mxu0 %v718
  %776 = vmatprep.subr.bf16.mxu0 0
  %777 = vmatpush1.bf16.msra.mxu0 %v719
  %778 = vmatprep.subr.bf16.mxu0 0
  %779 = vmatpush1.bf16.msra.mxu0 %v720
  %780 = vmatprep.subr.bf16.mxu0 0
  %781 = vmatpush1.bf16.msra.mxu0 %v721
  %782 = vmatprep.subr.bf16.mxu0 0
  %783 = vmatpush1.bf16.msra.mxu0 0
  %784 = vmatprep.subr.bf16.mxu0 0
  %785 = vmatpush1.bf16.msra.mxu0 0
  %786 = vmatprep.subr.bf16.mxu0 0
  %787 = vmatpush1.bf16.msra.mxu0 0
  %788 = vmatprep.subr.bf16.mxu0 0
  %789 = vmatpush1.bf16.msra.mxu0 0
  %790 = vmatprep.subr.bf16.mxu0 0
  %791 = vmatpush1.bf16.msra.mxu0 0
  %792 = vmatprep.subr.bf16.mxu0 0
  %793 = vmatpush1.bf16.msra.mxu0 0
  %794 = vmatprep.subr.bf16.mxu0 0
  %795 = vmatpush1.bf16.msra.mxu0 0
  %796 = vmatprep.subr.bf16.mxu0 0
  %797 = vmatpush1.bf16.msra.mxu0 0
  %798 = vmatprep.subr.bf16.mxu0 0
  %799 = vmatpush1.bf16.msra.mxu0 0
  %800 = vmatprep.subr.bf16.mxu0 0
  %801 = vmatpush1.bf16.msra.mxu0 0
  %802 = vmatprep.subr.bf16.mxu0 0
  %803 = vmatpush1.bf16.msra.mxu0 0
  %804 = vmatprep.subr.bf16.mxu0 0
  %805 = vmatpush1.bf16.msra.mxu0 0
  %806 = vmatprep.mubr.bf16.mxu0 0
  %807 = vmatmul.mubr.bf16.gmra.mrb[0].mxu0 %v727
  %v808 = vpop.f32.mrb[0].mxu0
  %v809 = vadd.f32 0.0, %v808
  %v810 = vpop.f32.mrb[0].mxu0
  %v811 = vpop.f32.mrb[0].mxu0
  %v812 = vadd.f32 0.0, %v811
  %v813 = vpop.f32.mrb[0].mxu0
  %814 = vmatprep.mubr.bf16.mxu0 0
  %815 = vmatmul.mubr.bf16.gmra.mrb[0].mxu0 %v730
  %v816 = vpop.f32.mrb[0].mxu0
  %v817 = vadd.f32 0.0, %v816
  %v818 = vpop.f32.mrb[0].mxu0
  %v819 = vpop.f32.mrb[0].mxu0
  %v820 = vadd.f32 0.0, %v819
  %v821 = vpop.f32.mrb[0].mxu0
  %822 = vmatprep.mubr.bf16.mxu0 0
  %823 = vmatmul.mubr.bf16.gmra.mrb[0].mxu0 %v733
  %v824 = vpop.f32.mrb[0].mxu0
  %v825 = vadd.f32 0.0, %v824
  %v826 = vpop.f32.mrb[0].mxu0
  %v827 = vpop.f32.mrb[0].mxu0
  %v828 = vadd.f32 0.0, %v827
  %v829 = vpop.f32.mrb[0].mxu0
  %830 = vmatprep.mubr.bf16.mxu0 0
  %831 = vmatmul.mubr.bf16.gmra.mrb[0].mxu0 %v736
  %v832 = vpop.f32.mrb[0].mxu0
  %v833 = vadd.f32 0.0, %v832
  %v834 = vpop.f32.mrb[0].mxu0
  %v835 = vpop.f32.mrb[0].mxu0
  %v836 = vadd.f32 0.0, %v835
  %v837 = vpop.f32.mrb[0].mxu0
  %838 = vmatprep.mubr.bf16.mxu0 0
  %839 = vmatmul.mubr.bf16.gmra.mrb[0].mxu0 %v739
  %v840 = vpop.f32.mrb[0].mxu0
  %v841 = vadd.f32 0.0, %v840
  %v842 = vpop.f32.mrb[0].mxu0
  %v843 = vpop.f32.mrb[0].mxu0
  %v844 = vadd.f32 0.0, %v843
  %v845 = vpop.f32.mrb[0].mxu0
  %846 = vmatprep.mubr.bf16.mxu0 0
  %847 = vmatmul.mubr.bf16.gmra.mrb[0].mxu0 %v742
  %v848 = vpop.f32.mrb[0].mxu0
  %v849 = vadd.f32 0.0, %v848
  %v850 = vpop.f32.mrb[0].mxu0
  %v851 = vpop.f32.mrb[0].mxu0
  %v852 = vadd.f32 0.0, %v851
  %v853 = vpop.f32.mrb[0].mxu0
  %854 = vmatprep.mubr.bf16.mxu0 0
  %855 = vmatmul.mubr.bf16.gmra.mrb[0].mxu0 %v745
  %v856 = vpop.f32.mrb[0].mxu0
  %v857 = vadd.f32 0.0, %v856
  %v858 = vpop.f32.mrb[0].mxu0
  %v859 = vpop.f32.mrb[0].mxu0
  %v860 = vadd.f32 0.0, %v859
  %v861 = vpop.f32.mrb[0].mxu0
  %862 = vmatprep.mubr.bf16.mxu0 0
  %863 = vmatmul.mubr.bf16.gmra.mrb[0].mxu0 %v748
  %v864 = vpop.f32.mrb[0].mxu0
  %v865 = vadd.f32 0.0, %v864
  %v866 = vpop.f32.mrb[0].mxu0
  %v867 = vpop.f32.mrb[0].mxu0
  %v868 = vadd.f32 0.0, %v867
  %v869 = vpop.f32.mrb[0].mxu0
  %870 = vmatprep.mubr.bf16.mxu0 0
  %871 = vmatmul.mubr.bf16.gmra.mrb[0].mxu0 %v751
  %v872 = vpop.f32.mrb[0].mxu0
  %v873 = vadd.f32 0.0, %v872
  %v874 = vpop.f32.mrb[0].mxu0
  %v875 = vpop.f32.mrb[0].mxu0
  %v876 = vadd.f32 0.0, %v875
  %v877 = vpop.f32.mrb[0].mxu0
  %878 = vmatprep.mubr.bf16.mxu0 0
  %879 = vmatmul.mubr.bf16.gmra.mrb[0].mxu0 %v754
  %v880 = vpop.f32.mrb[0].mxu0
  %v881 = vadd.f32 0.0, %v880
  %v882 = vpop.f32.mrb[0].mxu0
  %v883 = vpop.f32.mrb[0].mxu0
  %v884 = vadd.f32 0.0, %v883
  %v885 = vpop.f32.mrb[0].mxu0
  %886 = vmatprep.mubr.bf16.mxu0 0
  %887 = vmatmul.mubr.bf16.gmra.mrb[0].mxu0 %v757
  %v888 = vpop.f32.mrb[0].mxu0
  %v889 = vadd.f32 0.0, %v888
  %v890 = vpop.f32.mrb[0].mxu0
  %v891 = vpop.f32.mrb[0].mxu0
  %v892 = vadd.f32 0.0, %v891
  %v893 = vpop.f32.mrb[0].mxu0
  %894 = vmatprep.mubr.bf16.mxu0 0
  %895 = vmatmul.mubr.bf16.gmra.mrb[0].mxu0 %v760
  %v896 = vpop.f32.mrb[0].mxu0
  %v897 = vadd.f32 0.0, %v896
  %v898 = vpop.f32.mrb[0].mxu0
  %v899 = vpop.f32.mrb[0].mxu0
  %v900 = vadd.f32 0.0, %v899
  %v901 = vpop.f32.mrb[0].mxu0
  %902 = vmatprep.mubr.bf16.mxu0 0
  %903 = vmatmul.mubr.bf16.gmra.mrb[0].mxu0 %v763
  %v904 = vpop.f32.mrb[0].mxu0
  %v905 = vadd.f32 0.0, %v904
  %v906 = vpop.f32.mrb[0].mxu0
  %v907 = vpop.f32.mrb[0].mxu0
  %v908 = vadd.f32 0.0, %v907
  %v909 = vpop.f32.mrb[0].mxu0
  %910 = vmatprep.mubr.bf16.mxu0 0
  %911 = vmatmul.mubr.bf16.gmra.mrb[0].mxu0 %v766
  %v912 = vpop.f32.mrb[0].mxu0
  %v913 = vadd.f32 0.0, %v912
  %v914 = vpop.f32.mrb[0].mxu0
  %v915 = vpop.f32.mrb[0].mxu0
  %v916 = vadd.f32 0.0, %v915
  %v917 = vpop.f32.mrb[0].mxu0
  %918 = vmatprep.mubr.bf16.mxu0 0
  %919 = vmatmul.mubr.bf16.gmra.mrb[0].mxu0 %v769
  %v920 = vpop.f32.mrb[0].mxu0
  %v921 = vadd.f32 0.0, %v920
  %v922 = vpop.f32.mrb[0].mxu0
  %v923 = vpop.f32.mrb[0].mxu0
  %v924 = vadd.f32 0.0, %v923
  %v925 = vpop.f32.mrb[0].mxu0
  %926 = vmatprep.mubr.bf16.mxu0 0
  %927 = vmatmul.mubr.bf16.gmra.mrb[0].mxu0 %v772
  %v928 = vpop.f32.mrb[0].mxu0
  %v929 = vadd.f32 0.0, %v928
  %v930 = vpop.f32.mrb[0].mxu0
  %v931 = vpop.f32.mrb[0].mxu0
  %v932 = vadd.f32 0.0, %v931
  %v933 = vpop.f32.mrb[0].mxu0
  %934 = vdwg.mxu0
  %v935 = vtanh.pop %v809
  %v936 = vtanh.pop %v812
  %v937 = vtanh.pop %v817
  %v938 = vtanh.pop %v820
  %v939 = vtanh.pop %v825
  %v940 = vtanh.pop %v828
  %v941 = vtanh.pop %v833
  %v942 = vtanh.pop %v836
  %v943 = vtanh.pop %v841
  %v944 = vtanh.pop %v844
  %v945 = vtanh.pop %v849
  %v946 = vtanh.pop %v852
  %v947 = vtanh.pop %v857
  %v948 = vtanh.pop %v860
  %v949 = vtanh.pop %v865
  %v950 = vtanh.pop %v868
  %v951 = vtanh.pop %v873
  %v952 = vtanh.pop %v876
  %v953 = vtanh.pop %v881
  %v954 = vtanh.pop %v884
  %v955 = vtanh.pop %v889
  %v956 = vtanh.pop %v892
  %v957 = vtanh.pop %v897
  %v958 = vtanh.pop %v900
  %v959 = vtanh.pop %v905
  %v960 = vtanh.pop %v908
  %v961 = vtanh.pop %v913
  %v962 = vtanh.pop %v916
  %v963 = vtanh.pop %v921
  %v964 = vtanh.pop %v924
  %v965 = vtanh.pop %v929
  %v966 = vtanh.pop %v932
  %vm967 = vcmask 130048
  %968 = vst.msk [vmem:[%s4] sm:$0xff] %vm967, %v935
  %969 = vst.msk [vmem:[%s4 + $0x8] sm:$0xff] %vm967, %v936
  %970 = vst.msk [vmem:[%s4 + $0x10] sm:$0xff] %vm967, %v937
  %971 = vst.msk [vmem:[%s4 + $0x18] sm:$0xff] %vm967, %v938
  %972 = vst.msk [vmem:[%s4 + $0x20] sm:$0xff] %vm967, %v939
  %973 = vst.msk [vmem:[%s4 + $0x28] sm:$0xff] %vm967, %v940
  %974 = vst.msk [vmem:[%s4 + $0x30] sm:$0xff] %vm967, %v941
  %975 = vst.msk [vmem:[%s4 + $0x38] sm:$0xff] %vm967, %v942
  %976 = vst.msk [vmem:[%s4 + $0x40] sm:$0xff] %vm967, %v943
  %977 = vst.msk [vmem:[%s4 + $0x48] sm:$0xff] %vm967, %v944
  %978 = vst.msk [vmem:[%s4 + $0x50] sm:$0xff] %vm967, %v945
  %979 = vst.msk [vmem:[%s4 + $0x58] sm:$0xff] %vm967, %v946
  %980 = vst.msk [vmem:[%s4 + $0x60] sm:$0xff] %vm967, %v947
  %981 = vst.msk [vmem:[%s4 + $0x68] sm:$0xff] %vm967, %v948
  %982 = vst.msk [vmem:[%s4 + $0x70] sm:$0xff] %vm967, %v949
  %983 = vst.msk [vmem:[%s4 + $0x78] sm:$0xff] %vm967, %v950
  %984 = vst.msk [vmem:[%s4 + $0x80] sm:$0xff] %vm967, %v951
  %985 = vst.msk [vmem:[%s4 + $0x88] sm:$0xff] %vm967, %v952
  %986 = vst.msk [vmem:[%s4 + $0x90] sm:$0xff] %vm967, %v953
  %987 = vst.msk [vmem:[%s4 + $0x98] sm:$0xff] %vm967, %v954
  %988 = vst.msk [vmem:[%s4 + $0xa0] sm:$0xff] %vm967, %v955
  %989 = vst.msk [vmem:[%s4 + $0xa8] sm:$0xff] %vm967, %v956
  %990 = vst.msk [vmem:[%s4 + $0xb0] sm:$0xff] %vm967, %v957
  %991 = vst.msk [vmem:[%s4 + $0xb8] sm:$0xff] %vm967, %v958
  %992 = vst.msk [vmem:[%s4 + $0xc0] sm:$0xff] %vm967, %v959
  %993 = vst.msk [vmem:[%s4 + $0xc8] sm:$0xff] %vm967, %v960
  %994 = vst.msk [vmem:[%s4 + $0xd0] sm:$0xff] %vm967, %v961
  %995 = vst.msk [vmem:[%s4 + $0xd8] sm:$0xff] %vm967, %v962
  %996 = vst.msk [vmem:[%s4 + $0xe0] sm:$0xff] %vm967, %v963
  %997 = vst.msk [vmem:[%s4 + $0xe8] sm:$0xff] %vm967, %v964
  %998 = vst.msk [vmem:[%s4 + $0xf0] sm:$0xff] %vm967, %v965
  %999 = vst.msk [vmem:[%s4 + $0xf8] sm:$0xff] %vm967, %v966
  // Predicated region
  $region18: #{tpu_custom_call.1} parent=0 // pred_check
    _
  $region19: #{tpu_custom_call.1} parent=0 // pred_check_branch
    %1001 = sbr.rel (0) target = $region21
  $region20: #{tpu_custom_call.1} parent=0 // pred_region
    _
  $region21: #{tpu_custom_call.1} parent=0 // pred_fallthru
    _
  // Predicated region
  $region22: #{tpu_custom_call.1} parent=0 // pred_check
    _
  $region23: #{tpu_custom_call.1} parent=0 // pred_check_branch
    %1003 = sbr.rel (0) target = $region25
  $region24: #{tpu_custom_call.1} parent=0 // pred_region
    _
  $region25: #{tpu_custom_call.1} parent=0 // pred_fallthru
    _

</llo_original>
